<compile_context>
chip_gen: v5e
topology: v5e:2x2
jax: 0.10.0
libtpu: 0.0.40
codegen_flags: <defaults>
</compile_context>

<pallas_src>
import numpy as np
import jax
import jax.numpy as jnp
from jax.experimental import pallas as pl
from jax.experimental.pallas import tpu as pltpu


# ----------------------------------------------------------------------------
# Parameter setup (plain numpy glue, deterministic) — mirrors __init__.
# ----------------------------------------------------------------------------
def gaussian_basis_2d(x, y, sigma, max_ord):
    """Deterministic 2D Gaussian-derivative-style basis.
    Returns (n_filters, *x.shape) with orders (i, j), i + j <= max_ord,
    order (0,0) first (the smoothing filter)."""
    g = np.exp(-(x ** 2 + y ** 2) / (2.0 * sigma ** 2))
    out = []
    for total in range(max_ord + 1):
        for i in range(total, -1, -1):
            j = total - i
            out.append(((x / sigma) ** i) * ((y / sigma) ** j) * g)
    return np.stack(out, axis=0).astype(np.float32)


def compute_support(l1, l2, k):
    """Brute-force KDTree.query equivalent (k nearest neighbours, sorted)."""
    d2 = np.sum((l2[:, None, :] - l1[None, :, :]) ** 2, axis=-1)       # (N2, N1)
    idx = np.argsort(d2, axis=-1)[:, :k].astype(np.int32)              # (N2, K)
    dists = np.sqrt(np.take_along_axis(d2, idx, axis=-1)).astype(np.float32)
    patches = l1[idx] - l2[:, None, :]                                  # (N2, K, 2)
    mean_dists = np.clip(dists[:, 1:7].mean(axis=-1), 1e-6, None)
    patches = patches / mean_dists[:, None, None]
    return patches.astype(np.float32), idx


def compute_filter_weights(patch_coords, sigma, max_ord):
    x, y = patch_coords[..., 0], patch_coords[..., 1]
    w = gaussian_basis_2d(x, y, sigma, max_ord)                         # (F, N2, K)
    w = w.copy()
    w[1:] = w[1:] - np.mean(w[1:], axis=-1, keepdims=True)
    norm = np.clip(np.sqrt(np.sum(w[1:] ** 2, axis=-1, keepdims=True)), 1e-6, None)
    w[1:] = w[1:] / norm
    s = np.clip(np.sum(w[0], axis=-1, keepdims=True), 1e-6, None)
    w[0] = w[0] / s
    return w.astype(np.float32)


def fold_filter_weights(idx_np, w_np, n1):
    """Fold the static gather and filter weights into one matrix.

    A[m, f*N2 + n] = sum_k W[f, n, k] * (idx[n, k] == m)      -> (N1, F*N2)

    Duplicate indices within idx[n, :] are summed, matching the
    gather + einsum semantics of the PyTorch forward.
    """
    f, n2, k = w_np.shape
    a = np.zeros((n1, f, n2), np.float32)
    cols = np.broadcast_to(np.arange(n2, dtype=np.int64)[:, None], (n2, k))
    for ff in range(f):
        np.add.at(a[:, ff, :], (idx_np.astype(np.int64), cols), w_np[ff])
    return a.reshape(n1, f * n2)


# ----------------------------------------------------------------------------
# Pallas kernel: one lane-dense MXU matmul per BC tile.
# ----------------------------------------------------------------------------
def gconv_kernel(x_ref, a_ref, o_ref):
    # x_ref: (TILE_BC, N1_pad), a_ref: (N1_pad, FN2_pad), o_ref: (TILE_BC, FN2_pad)
    o_ref[...] = jnp.dot(
        x_ref[...], a_ref[...], preferred_element_type=jnp.float32
    ).astype(o_ref.dtype)


def gconv_forward(x, a_matrix, n_filters, n2, tile_bc=256, use_bf16=False):
    """x: (B, C, N1) f32; a_matrix: (N1, F*N2) f32 (folded idx + weights)
    -> (B, C, F, N2) f32"""
    b, c, n1 = x.shape
    fn2 = n_filters * n2
    assert a_matrix.shape == (n1, fn2)
    bc = b * c

    def rup(v, m):
        return ((v + m - 1) // m) * m

    # Lane-dense / MXU-aligned padding.
    n1_pad = rup(n1, 128)
    fn2_pad = rup(fn2, 128)
    tile_bc = max(8, min(tile_bc, rup(bc, 8)))
    bc_pad = rup(bc, tile_bc)

    # bf16 operands halve HBM traffic / VMEM footprint (f32 accumulation kept);
    # most useful on v5e/v6e where f32 MXU throughput is the weak point.
    op_dtype = jnp.bfloat16 if use_bf16 else jnp.float32

    x2 = x.reshape(bc, n1).astype(op_dtype)
    x2 = jnp.pad(x2, ((0, bc_pad - bc), (0, n1_pad - n1)))
    a = jnp.asarray(a_matrix).astype(op_dtype)
    a = jnp.pad(a, ((0, n1_pad - n1), (0, fn2_pad - fn2)))

    grid = (bc_pad // tile_bc,)

    elt = 2 if use_bf16 else 4
    cost = pl.CostEstimate(
        flops=2 * bc_pad * n1_pad * fn2_pad,
        transcendentals=0,
        bytes_accessed=elt * (bc_pad * n1_pad + n1_pad * fn2_pad)
        + 4 * bc_pad * fn2_pad,
    )
    # Double-buffered x/out tiles + (conservatively double-buffered) resident A,
    # clamped so it is always legal on v7x's 64 MiB physical VMEM.
    vmem_bytes = (2 * tile_bc * (n1_pad + fn2_pad) + 2 * n1_pad * fn2_pad) * 4
    vmem_limit = int(min(max(2 * vmem_bytes, 4 << 20), 64 << 20))

    out = pl.pallas_call(
        gconv_kernel,
        out_shape=jax.ShapeDtypeStruct((bc_pad, fn2_pad), jnp.float32),
        grid=grid,
        in_specs=[
            pl.BlockSpec((tile_bc, n1_pad), lambda i: (i, 0)),
            pl.BlockSpec((n1_pad, fn2_pad), lambda i: (0, 0)),
        ],
        out_specs=pl.BlockSpec((tile_bc, fn2_pad), lambda i: (i, 0)),
        compiler_params=pltpu.CompilerParams(
            dimension_semantics=("parallel",),
            vmem_limit_bytes=vmem_limit,
        ),
        cost_estimate=cost,
    )(x2, a)

    return out[:bc, :fn2].reshape(b, c, n_filters, n2)


# ----------------------------------------------------------------------------
# Demo / correctness check
# ----------------------------------------------------------------------------
if __name__ == "__main__":
    # Geometry: l1 = 16x16 grid (N1=256), l2 = 8x8 grid (N2=64), K=8 neighbours.
    B, C, K, SIGMA, MAX_ORD = 2, 8, 8, 1.0, 2

    g1 = np.linspace(0.0, 1.0, 16, dtype=np.float32)
    l1 = np.stack(np.meshgrid(g1, g1, indexing="ij"), axis=-1).reshape(-1, 2)  # (256, 2)
    g2 = np.linspace(0.0, 1.0, 8, dtype=np.float32)
    l2 = np.stack(np.meshgrid(g2, g2, indexing="ij"), axis=-1).reshape(-1, 2)  # (64, 2)

    patches, idx_np = compute_support(l1, l2, K)
    w_np = compute_filter_weights(patches, SIGMA, MAX_ORD)                     # (6, 64, 8)

    N1 = l1.shape[0]
    N2, F = idx_np.shape[0], w_np.shape[0]

    # Fold static gather indices + filter weights into one (N1, F*N2) matrix.
    a_np = fold_filter_weights(idx_np, w_np, N1)

    key = jax.random.PRNGKey(0)
    x = jax.random.normal(key, (B, C, N1), dtype=jnp.float32)

    a_matrix = jnp.asarray(a_np, dtype=jnp.float32)

    # tile_bc=8 -> 2-point parallel grid at this small BC (=16); at realistic
    # BC keep the default (256) and sweep 128..512 for v7x's smaller VMEM.
    out = gconv_forward(x, a_matrix, F, N2, tile_bc=8)
    out = jax.block_until_ready(out)

    # Pure-JAX reference of the PyTorch forward (gather + einsum).
    idx = jnp.asarray(idx_np, dtype=jnp.int32)
    w = jnp.asarray(w_np, dtype=jnp.float32)
    xg_ref = jnp.take(x, idx, axis=2)                                # (B, C, N2, K)
    out_ref = jnp.einsum("bcnk,fnk->bcfn", xg_ref, w)

    assert out.shape == (B, C, F, N2)
    np.testing.assert_allclose(np.asarray(out), np.asarray(out_ref),
                               rtol=1e-4, atol=1e-4)
    print("KERNEL_OK")
</pallas_src>

<mosaic_0001>
module attributes {stable_mosaic.version = 11 : i64} {
  func.func @gconv_kernel(%arg0: i32, %arg1: memref<8x256xf32, #tpu.memory_space<vmem>>, %arg2: memref<256x384xf32, #tpu.memory_space<vmem>>, %arg3: memref<8x384xf32, #tpu.memory_space<vmem>>) attributes {dimension_semantics = [#tpu.dimension_semantics<parallel>], iteration_bounds = array<i64: 2>, scalar_prefetch = 0 : i64, scratch_operands = 0 : i64, tpu.core_type = #tpu.core_type<tc>, window_params = [{transform_indices = @transform_0, window_bounds = array<i64: 8, 256>}, {pipeline_mode = #tpu.pipeline_mode<synchronous>, transform_indices = @transform_1, window_bounds = array<i64: 256, 384>}, {transform_indices = @transform_2, window_bounds = array<i64: 8, 384>}]} {
    %c0 = arith.constant 0 : index
    %c0_0 = arith.constant 0 : index
    %0 = vector.load %arg1[%c0, %c0_0] : memref<8x256xf32, #tpu.memory_space<vmem>>, vector<8x256xf32>
    %c0_1 = arith.constant 0 : index
    %c0_2 = arith.constant 0 : index
    %1 = vector.load %arg2[%c0_1, %c0_2] : memref<256x384xf32, #tpu.memory_space<vmem>>, vector<256x384xf32>
    %cst = arith.constant dense<0.000000e+00> : vector<8x384xf32>
    %2 = tpu.matmul %0, %1, %cst {dimension_numbers = #tpu.dot_dimension_numbers<[1], [0], [0], [1], [0, 0, 1, 1], [], []>} : vector<8x256xf32>, vector<256x384xf32>, vector<8x384xf32> -> vector<8x384xf32>
    %c0_3 = arith.constant 0 : index
    %c0_4 = arith.constant 0 : index
    %3 = vector.load %arg3[%c0_3, %c0_4] : memref<8x384xf32, #tpu.memory_space<vmem>>, vector<8x384xf32>
    tpu.vector_store %arg3[%c0_3, %c0_4], %2 {strides = array<i32>} : memref<8x384xf32, #tpu.memory_space<vmem>>, vector<8x384xf32>,
    return
  }
  func.func @transform_0(%arg0: i32) -> (i32, i32) {
    %c0_i32 = arith.constant 0 : i32
    %c0_i32_0 = arith.constant 0 : i32
    return %arg0, %c0_i32 : i32, i32
  }
  func.func @transform_1(%arg0: i32) -> (i32, i32) {
    %c0_i32 = arith.constant 0 : i32
    %c0_i32_0 = arith.constant 0 : i32
    %c0_i32_1 = arith.constant 0 : i32
    return %c0_i32, %c0_i32_0 : i32, i32
  }
  func.func @transform_2(%arg0: i32) -> (i32, i32) {
    %c0_i32 = arith.constant 0 : i32
    %c0_i32_0 = arith.constant 0 : i32
    return %arg0, %c0_i32 : i32, i32
  }
}

</mosaic_0001>

<llo_original>
// kernel: tpu_custom_call.1
$region0: #{tpu_custom_call.1}
  #allocation0 [shape = 'u32[]', space=smem, size = 0x4, offset = 0x4, fixed_abs, tag = 'smem constant byte address 0x4 - core index']
  #allocation1 [shape = 'u32[72,128]{1,0:T(1,128)}', space=vmem, size = 0x9000, scoped, tag = 'internal scratch']
  %s0 = inlined_call_operand.hbm [shape: f32[16,256], index: 0, kind: input, shape index: {}]
  %s1 = inlined_call_operand.hbm [shape: f32[256,384], index: 1, kind: input, shape index: {}]
  %s2 = inlined_call_operand.hbm [shape: f32[16,384], index: 2, kind: output, shape index: {}]
  %s3 = sld [smem:[#allocation0]]
  $region49: #{tpu_custom_call.1} parent=0
    _
  %s5 = ssub.s32 1, %s3
  %s6 = scalar_select 0, %s5, %s3
  $region1: #{tpu_custom_call.1} parent=0
    #allocation2 [shape = 'u8[16384]{0}', space=vmem, size = 0x4000, scoped, tag = 'input window, operand 0']
    #allocation3 [shape = 's32[2]{0}', space=sflag, size = 0x8, scoped, tag = 'scoped memory for tpu_custom_call.1']
    #allocation4 [shape = 's32[2]{0}', space=sflag, size = 0x8, scoped, tag = 'scoped memory for tpu_custom_call.1']
    #allocation5 [shape = 'u8[393216]{0}', space=vmem, size = 0x60000, scoped, tag = 'input window, operand 1, single buffered']
    #allocation6 [shape = 's32[1]{0}', space=sflag, size = 0x4, scoped, tag = 'scoped memory for tpu_custom_call.1']
    #allocation7 [shape = 'u8[24576]{0}', space=vmem, size = 0x6000, scoped, tag = 'output window, operand 0']
    %7 = vsyncpa [#allocation3], 0
    %s8 = scalar_lea.sflag [#allocation3], 1
    %9 = vsyncpa %s8, 0
    %10 = vsyncpa [#allocation6], 0
    %11 = vsyncpa [#allocation4], 0
    %s12 = scalar_lea.sflag [#allocation4], 1
    %13 = vsyncpa %s12, 0
    loop: start=0, step=1, limit=4
    $region2: #{tpu_custom_call.1} parent=1 // loop_pre_header
      _
    $region3: #{tpu_custom_call.1} parent=1 // loop_header
      %s15 = sphi 0, %s19
      %p16 = scmp.ge.s32.totalorder %s15, 4
      %s25 = sphi 0, %s27
      %s28 = sphi 0, %s25
      %s29 = sphi 0, %s28
      %s45 = sphi 0, %s29
      %s49 = sphi 0, %s49
      %s51 = sphi 0, %s49
      %s52 = sphi 0, %s51
      %s66 = sphi 0, %s52
      %s72 = sphi 0, %s74
      %s75 = sphi 0, %s72
      %s76 = sphi 0, %s75
      %s92 = sphi 0, %s76
    $region4: #{tpu_custom_call.1} parent=1 // loop_header_branch
      %18 = sbr.rel (%p16) target = $region8
    $region5: #{tpu_custom_call.1} parent=1 // loop_body
      %s20 = ssub.s32 %s15, 1
      %s21 = ssub.s32 %s15, 2
      %s22 = sadd.s32 %s15, 1
      %s23 = ssub.s32 %s15, %s22
      %p24 = scmp.eq.s32.totalorder %s23, 0
      %s26 = sadd.s32 %s25, 1
      %s27 = scalar_select %p24, %s25, %s26
      %p30 = pneg %p24
      %p31 = scmp.eq.s32.totalorder %s15, 1
      %p32 = por %p30, %p31
      %p33 = scmp.ne.s32.totalorder %s25, %s28
      %p34 = scmp.eq.s32.totalorder %s15, 0
      %p35 = por %p33, %p34
      %p36 = scmp.ne.s32.totalorder %s25, %s28
      %p37 = scmp.eq.s32.totalorder %s20, 1
      %p38 = por %p36, %p37
      %p39 = scmp.ne.s32.totalorder %s28, %s29
      %p40 = scmp.eq.s32.totalorder %s20, 0
      %p41 = por %p39, %p40
      %p42 = scmp.ne.s32.totalorder %s28, %s29
      %p43 = scmp.eq.s32.totalorder %s21, 1
      %p44 = por %p42, %p43
      %p46 = scmp.ne.s32.totalorder %s29, %s45
      %p47 = scmp.eq.s32.totalorder %s21, 0
      %p48 = por %p46, %p47
      %s50 = sadd.s32 %s49, 1
      %p53 = scmp.eq.s32.totalorder %s15, 1
      %p54 = scmp.ne.s32.totalorder %s49, %s51
      %p55 = scmp.eq.s32.totalorder %s15, 0
      %p56 = por %p54, %p55
      %p57 = scmp.ne.s32.totalorder %s49, %s51
      %p58 = scmp.eq.s32.totalorder %s20, 1
      %p59 = por %p57, %p58
      %p60 = scmp.ne.s32.totalorder %s51, %s52
      %p61 = scmp.eq.s32.totalorder %s20, 0
      %p62 = por %p60, %p61
      %p63 = scmp.ne.s32.totalorder %s51, %s52
      %p64 = scmp.eq.s32.totalorder %s21, 1
      %p65 = por %p63, %p64
      %p67 = scmp.ne.s32.totalorder %s52, %s66
      %p68 = scmp.eq.s32.totalorder %s21, 0
      %p69 = por %p67, %p68
      %s70 = ssub.s32 %s15, %s22
      %p71 = scmp.eq.s32.totalorder %s70, 0
      %s73 = sadd.s32 %s72, 1
      %s74 = scalar_select %p71, %s72, %s73
      %p77 = pneg %p71
      %p78 = scmp.eq.s32.totalorder %s15, 1
      %p79 = por %p77, %p78
      %p80 = scmp.ne.s32.totalorder %s72, %s75
      %p81 = scmp.eq.s32.totalorder %s15, 0
      %p82 = por %p80, %p81
      %p83 = scmp.ne.s32.totalorder %s72, %s75
      %p84 = scmp.eq.s32.totalorder %s20, 1
      %p85 = por %p83, %p84
      %p86 = scmp.ne.s32.totalorder %s75, %s76
      %p87 = scmp.eq.s32.totalorder %s20, 0
      %p88 = por %p86, %p87
      %p89 = scmp.ne.s32.totalorder %s75, %s76
      %p90 = scmp.eq.s32.totalorder %s21, 1
      %p91 = por %p89, %p90
      %p93 = scmp.ne.s32.totalorder %s76, %s92
      %p94 = scmp.eq.s32.totalorder %s21, 0
      %p95 = por %p93, %p94
      %p96 = scmp.le.s32.totalorder 1, %s15
      %p97 = scmp.lt.s32.totalorder %s15, 3
      %p98 = pnand %p96, %p97
      %p99 = pneg %p98
      // Predicated region
      $region9: #{tpu_custom_call.1} parent=5 // pred_check
        _
      $region10: #{tpu_custom_call.1} parent=5 // pred_check_branch
        %101 = sbr.rel (%p98) target = $region12
      $region11: #{tpu_custom_call.1} parent=5 // pred_region
        %s102 = ssub.s32 %s15, 1
        // Predicated region
        $region13: #{tpu_custom_call.1} parent=11 // pred_check
          %p103 = pneg %p62
        $region14: #{tpu_custom_call.1} parent=11 // pred_check_branch
          %105 = sbr.rel (%p103) target = $region16
        $region15: #{tpu_custom_call.1} parent=11 // pred_region
          %107 = vsyncadd [#allocation6], 0
          %s108 = sshll.u32 %s1, 4
          %s109 = int_to_ptr.hbm [resolvable:$true] %s108
          %s110 = sshll.u32 [#allocation5], 4
          %s111 = int_to_ptr.vmem [resolvable:$true] %s110
          %116 = dma.hbm_to_vmem [thread:$0]  %s109, 12288, %s111, [#allocation6], 384, 384, 24
        $region16: #{tpu_custom_call.1} parent=11 // pred_fallthru
          _
      $region12: #{tpu_custom_call.1} parent=5 // pred_fallthru
        _
      %p117 = scmp.lt.s32.totalorder %s15, 2
      // Predicated region
      $region17: #{tpu_custom_call.1} parent=5 // pred_check
        %p118 = pneg %p117
      $region18: #{tpu_custom_call.1} parent=5 // pred_check_branch
        %120 = sbr.rel (%p118) target = $region20
      $region19: #{tpu_custom_call.1} parent=5 // pred_region
        // Predicated region
        $region21: #{tpu_custom_call.1} parent=19 // pred_check
          %p121 = pneg %p35
        $region22: #{tpu_custom_call.1} parent=19 // pred_check_branch
          %123 = sbr.rel (%p121) target = $region24
        $region23: #{tpu_custom_call.1} parent=19 // pred_region
          %s124 = sand.u32 %s25, 1
          %s125 = scalar_lea.sflag [#allocation3], %s124
          %s126 = sand.u32 %s25, 1
          %s127 = smul.addr %s126, 16
          %s128 = scalar_lea.vmem [#allocation2], %s127
          %130 = vsyncadd %s125, 0
          %s131 = smul.addr %s15, 2
          %s132 = smul.addr %s131, 8
          %s133 = scalar_lea.hbm %s0, %s132
          %s135 = sshll.u32 %s133, 4
          %s136 = int_to_ptr.hbm [resolvable:$true] %s135
          %s137 = sshll.u32 %s128, 4
          %s138 = int_to_ptr.vmem [resolvable:$true] %s137
          %140 = dma.hbm_to_vmem [thread:$0]  %s136, 256, %s138, %s125
        $region24: #{tpu_custom_call.1} parent=19 // pred_fallthru
          _
      $region20: #{tpu_custom_call.1} parent=5 // pred_fallthru
        _
      %p141 = scmp.le.s32.totalorder 1, %s15
      %p142 = scmp.lt.s32.totalorder %s15, 3
      %p143 = pnand %p141, %p142
      %p144 = pneg %p143
      // Predicated region
      $region25: #{tpu_custom_call.1} parent=5 // pred_check
        _
      $region26: #{tpu_custom_call.1} parent=5 // pred_check_branch
        %146 = sbr.rel (%p143) target = $region28
      $region27: #{tpu_custom_call.1} parent=5 // pred_region
        %s147 = ssub.s32 %s15, 1
        %s148 = sand.u32 %s28, 1
        %s149 = scalar_lea.sflag [#allocation3], %s148
        %s150 = sand.u32 %s28, 1
        %s151 = smul.addr %s150, 16
        %s152 = scalar_lea.vmem [#allocation2], %s151
        // Predicated region
        $region29: #{tpu_custom_call.1} parent=27 // pred_check
          %p153 = pneg %p41
        $region30: #{tpu_custom_call.1} parent=27 // pred_check_branch
          %155 = sbr.rel (%p153) target = $region32
        $region31: #{tpu_custom_call.1} parent=27 // pred_region
          %157 = dma.done %s149, 256
        $region32: #{tpu_custom_call.1} parent=27 // pred_fallthru
          _
        // Predicated region
        $region33: #{tpu_custom_call.1} parent=27 // pred_check
          %p158 = pneg %p62
        $region34: #{tpu_custom_call.1} parent=27 // pred_check_branch
          %160 = sbr.rel (%p158) target = $region36
        $region35: #{tpu_custom_call.1} parent=27 // pred_region
          %162 = dma.done [#allocation6], 12288
        $region36: #{tpu_custom_call.1} parent=27 // pred_fallthru
          _
        %s163 = sand.u32 %s28, 1
        %s164 = scalar_lea.sflag [#allocation3], %s163
        %s165 = sand.u32 %s28, 1
        %s166 = smul.addr %s165, 16
        %s167 = scalar_lea.vmem [#allocation2], %s166
        %p168 = pneg %p41
        %p169 = pneg %p38
        %p170 = pneg %p62
        %p171 = pneg %p59
        %p172 = pneg %p88
        %p173 = pneg %p85
        %s174 = sand.u32 %s75, 1
        %s175 = scalar_lea.sflag [#allocation4], %s174
        %s176 = sand.u32 %s75, 1
        %s177 = smul.addr %s176, 24
        %s178 = scalar_lea.vmem [#allocation7], %s177
        %v179 = vld [vmem:[%s152] sm:$0xff]
        %v180 = vld [vmem:[%s152 + $0x8] sm:$0xff]
        %v181 = vld [vmem:[#allocation5] sm:$0xff]
        %v182 = vld [vmem:[#allocation5 + $0x8] sm:$0xff]
        %v183 = vld [vmem:[#allocation5 + $0x10] sm:$0xff]
        %v184 = vld [vmem:[#allocation5 + $0x18] sm:$0xff]
        %v185 = vld [vmem:[#allocation5 + $0x20] sm:$0xff]
        %v186 = vld [vmem:[#allocation5 + $0x28] sm:$0xff]
        %v187 = vld [vmem:[#allocation5 + $0x30] sm:$0xff]
        %v188 = vld [vmem:[#allocation5 + $0x38] sm:$0xff]
        %v189 = vld [vmem:[#allocation5 + $0x40] sm:$0xff]
        %v190 = vld [vmem:[#allocation5 + $0x48] sm:$0xff]
        %v191 = vld [vmem:[#allocation5 + $0x50] sm:$0xff]
        %v192 = vld [vmem:[#allocation5 + $0x58] sm:$0xff]
        %v193 = vld [vmem:[#allocation5 + $0x60] sm:$0xff]
        %v194 = vld [vmem:[#allocation5 + $0x68] sm:$0xff]
        %v195 = vld [vmem:[#allocation5 + $0x70] sm:$0xff]
        %v196 = vld [vmem:[#allocation5 + $0x78] sm:$0xff]
        %v197 = vld [vmem:[#allocation5 + $0x80] sm:$0xff]
        %v198 = vld [vmem:[#allocation5 + $0x88] sm:$0xff]
        %v199 = vld [vmem:[#allocation5 + $0x90] sm:$0xff]
        %v200 = vld [vmem:[#allocation5 + $0x98] sm:$0xff]
        %v201 = vld [vmem:[#allocation5 + $0xa0] sm:$0xff]
        %v202 = vld [vmem:[#allocation5 + $0xa8] sm:$0xff]
        %v203 = vld [vmem:[#allocation5 + $0xb0] sm:$0xff]
        %v204 = vld [vmem:[#allocation5 + $0xb8] sm:$0xff]
        %v205 = vld [vmem:[#allocation5 + $0xc0] sm:$0xff]
        %v206 = vld [vmem:[#allocation5 + $0xc8] sm:$0xff]
        %v207 = vld [vmem:[#allocation5 + $0xd0] sm:$0xff]
        %v208 = vld [vmem:[#allocation5 + $0xd8] sm:$0xff]
        %v209 = vld [vmem:[#allocation5 + $0xe0] sm:$0xff]
        %v210 = vld [vmem:[#allocation5 + $0xe8] sm:$0xff]
        %v211 = vld [vmem:[#allocation5 + $0xf0] sm:$0xff]
        %v212 = vld [vmem:[#allocation5 + $0xf8] sm:$0xff]
        %v213 = vld [vmem:[#allocation5 + $0x100] sm:$0xff]
        %v214 = vld [vmem:[#allocation5 + $0x108] sm:$0xff]
        %v215 = vld [vmem:[#allocation5 + $0x110] sm:$0xff]
        %v216 = vld [vmem:[#allocation5 + $0x118] sm:$0xff]
        %v217 = vld [vmem:[#allocation5 + $0x120] sm:$0xff]
        %v218 = vld [vmem:[#allocation5 + $0x128] sm:$0xff]
        %v219 = vld [vmem:[#allocation5 + $0x130] sm:$0xff]
        %v220 = vld [vmem:[#allocation5 + $0x138] sm:$0xff]
        %v221 = vld [vmem:[#allocation5 + $0x140] sm:$0xff]
        %v222 = vld [vmem:[#allocation5 + $0x148] sm:$0xff]
        %v223 = vld [vmem:[#allocation5 + $0x150] sm:$0xff]
        %v224 = vld [vmem:[#allocation5 + $0x158] sm:$0xff]
        %v225 = vld [vmem:[#allocation5 + $0x160] sm:$0xff]
        %v226 = vld [vmem:[#allocation5 + $0x168] sm:$0xff]
        %v227 = vld [vmem:[#allocation5 + $0x170] sm:$0xff]
        %v228 = vld [vmem:[#allocation5 + $0x178] sm:$0xff]
        %v229 = vld [vmem:[#allocation5 + $0x180] sm:$0xff]
        %v230 = vld [vmem:[#allocation5 + $0x188] sm:$0xff]
        %v231 = vld [vmem:[#allocation5 + $0x190] sm:$0xff]
        %v232 = vld [vmem:[#allocation5 + $0x198] sm:$0xff]
        %v233 = vld [vmem:[#allocation5 + $0x1a0] sm:$0xff]
        %v234 = vld [vmem:[#allocation5 + $0x1a8] sm:$0xff]
        %v235 = vld [vmem:[#allocation5 + $0x1b0] sm:$0xff]
        %v236 = vld [vmem:[#allocation5 + $0x1b8] sm:$0xff]
        %v237 = vld [vmem:[#allocation5 + $0x1c0] sm:$0xff]
        %v238 = vld [vmem:[#allocation5 + $0x1c8] sm:$0xff]
        %v239 = vld [vmem:[#allocation5 + $0x1d0] sm:$0xff]
        %v240 = vld [vmem:[#allocation5 + $0x1d8] sm:$0xff]
        %v241 = vld [vmem:[#allocation5 + $0x1e0] sm:$0xff]
        %v242 = vld [vmem:[#allocation5 + $0x1e8] sm:$0xff]
        %v243 = vld [vmem:[#allocation5 + $0x1f0] sm:$0xff]
        %v244 = vld [vmem:[#allocation5 + $0x1f8] sm:$0xff]
        %v245 = vld [vmem:[#allocation5 + $0x200] sm:$0xff]
        %v246 = vld [vmem:[#allocation5 + $0x208] sm:$0xff]
        %v247 = vld [vmem:[#allocation5 + $0x210] sm:$0xff]
        %v248 = vld [vmem:[#allocation5 + $0x218] sm:$0xff]
        %v249 = vld [vmem:[#allocation5 + $0x220] sm:$0xff]
        %v250 = vld [vmem:[#allocation5 + $0x228] sm:$0xff]
        %v251 = vld [vmem:[#allocation5 + $0x230] sm:$0xff]
        %v252 = vld [vmem:[#allocation5 + $0x238] sm:$0xff]
        %v253 = vld [vmem:[#allocation5 + $0x240] sm:$0xff]
        %v254 = vld [vmem:[#allocation5 + $0x248] sm:$0xff]
        %v255 = vld [vmem:[#allocation5 + $0x250] sm:$0xff]
        %v256 = vld [vmem:[#allocation5 + $0x258] sm:$0xff]
        %v257 = vld [vmem:[#allocation5 + $0x260] sm:$0xff]
        %v258 = vld [vmem:[#allocation5 + $0x268] sm:$0xff]
        %v259 = vld [vmem:[#allocation5 + $0x270] sm:$0xff]
        %v260 = vld [vmem:[#allocation5 + $0x278] sm:$0xff]
        %v261 = vld [vmem:[#allocation5 + $0x280] sm:$0xff]
        %v262 = vld [vmem:[#allocation5 + $0x288] sm:$0xff]
        %v263 = vld [vmem:[#allocation5 + $0x290] sm:$0xff]
        %v264 = vld [vmem:[#allocation5 + $0x298] sm:$0xff]
        %v265 = vld [vmem:[#allocation5 + $0x2a0] sm:$0xff]
        %v266 = vld [vmem:[#allocation5 + $0x2a8] sm:$0xff]
        %v267 = vld [vmem:[#allocation5 + $0x2b0] sm:$0xff]
        %v268 = vld [vmem:[#allocation5 + $0x2b8] sm:$0xff]
        %v269 = vld [vmem:[#allocation5 + $0x2c0] sm:$0xff]
        %v270 = vld [vmem:[#allocation5 + $0x2c8] sm:$0xff]
        %v271 = vld [vmem:[#allocation5 + $0x2d0] sm:$0xff]
        %v272 = vld [vmem:[#allocation5 + $0x2d8] sm:$0xff]
        %v273 = vld [vmem:[#allocation5 + $0x2e0] sm:$0xff]
        %v274 = vld [vmem:[#allocation5 + $0x2e8] sm:$0xff]
        %v275 = vld [vmem:[#allocation5 + $0x2f0] sm:$0xff]
        %v276 = vld [vmem:[#allocation5 + $0x2f8] sm:$0xff]
        %277 = vmatpush.msra.mxu0 %v226
        %278 = vmatpush.msra.mxu0 %v223
        %279 = vmatpush.msra.mxu0 %v220
        %280 = vmatpush.msra.mxu0 %v217
        %281 = vmatpush.msra.mxu0 %v214
        %282 = vmatpush.msra.mxu0 %v211
        %283 = vmatpush.msra.mxu0 %v208
        %284 = vmatpush.msra.mxu0 %v205
        %285 = vmatpush.msra.mxu0 %v202
        %286 = vmatpush.msra.mxu0 %v199
        %287 = vmatpush.msra.mxu0 %v196
        %288 = vmatpush.msra.mxu0 %v193
        %289 = vmatpush.msra.mxu0 %v190
        %290 = vmatpush.msra.mxu0 %v187
        %291 = vmatpush.msra.mxu0 %v184
        %292 = vmatpush.msra.mxu0 %v181
        %293 = vmatmul.f32.gmra.mxu0 %v179
        %v294 = vpop.f32.mrf.mxu0
        %v295 = vadd.f32 0.0, %v294
        %296 = vdwg.mxu0
        %297 = vmatpush.msra.mxu0 %v274
        %298 = vmatpush.msra.mxu0 %v271
        %299 = vmatpush.msra.mxu0 %v268
        %300 = vmatpush.msra.mxu0 %v265
        %301 = vmatpush.msra.mxu0 %v262
        %302 = vmatpush.msra.mxu0 %v259
        %303 = vmatpush.msra.mxu0 %v256
        %304 = vmatpush.msra.mxu0 %v253
        %305 = vmatpush.msra.mxu0 %v250
        %306 = vmatpush.msra.mxu0 %v247
        %307 = vmatpush.msra.mxu0 %v244
        %308 = vmatpush.msra.mxu0 %v241
        %309 = vmatpush.msra.mxu0 %v238
        %310 = vmatpush.msra.mxu0 %v235
        %311 = vmatpush.msra.mxu0 %v232
        %312 = vmatpush.msra.mxu0 %v229
        %313 = vmatmul.f32.gmra.mxu0 %v180
        %v314 = vpop.f32.mrf.mxu0
        %v315 = vadd.f32 %v295, %v314
        %316 = vdwg.mxu0
        %317 = vmatpush.msra.mxu0 %v227
        %318 = vmatpush.msra.mxu0 %v224
        %319 = vmatpush.msra.mxu0 %v221
        %320 = vmatpush.msra.mxu0 %v218
        %321 = vmatpush.msra.mxu0 %v215
        %322 = vmatpush.msra.mxu0 %v212
        %323 = vmatpush.msra.mxu0 %v209
        %324 = vmatpush.msra.mxu0 %v206
        %325 = vmatpush.msra.mxu0 %v203
        %326 = vmatpush.msra.mxu0 %v200
        %327 = vmatpush.msra.mxu0 %v197
        %328 = vmatpush.msra.mxu0 %v194
        %329 = vmatpush.msra.mxu0 %v191
        %330 = vmatpush.msra.mxu0 %v188
        %331 = vmatpush.msra.mxu0 %v185
        %332 = vmatpush.msra.mxu0 %v182
        %333 = vmatmul.f32.gmra.mxu0 %v179
        %v334 = vpop.f32.mrf.mxu0
        %v335 = vadd.f32 0.0, %v334
        %336 = vdwg.mxu0
        %337 = vmatpush.msra.mxu0 %v275
        %338 = vmatpush.msra.mxu0 %v272
        %339 = vmatpush.msra.mxu0 %v269
        %340 = vmatpush.msra.mxu0 %v266
        %341 = vmatpush.msra.mxu0 %v263
        %342 = vmatpush.msra.mxu0 %v260
        %343 = vmatpush.msra.mxu0 %v257
        %344 = vmatpush.msra.mxu0 %v254
        %345 = vmatpush.msra.mxu0 %v251
        %346 = vmatpush.msra.mxu0 %v248
        %347 = vmatpush.msra.mxu0 %v245
        %348 = vmatpush.msra.mxu0 %v242
        %349 = vmatpush.msra.mxu0 %v239
        %350 = vmatpush.msra.mxu0 %v236
        %351 = vmatpush.msra.mxu0 %v233
        %352 = vmatpush.msra.mxu0 %v230
        %353 = vmatmul.f32.gmra.mxu0 %v180
        %v354 = vpop.f32.mrf.mxu0
        %v355 = vadd.f32 %v335, %v354
        %356 = vdwg.mxu0
        %357 = vmatpush.msra.mxu0 %v228
        %358 = vmatpush.msra.mxu0 %v225
        %359 = vmatpush.msra.mxu0 %v222
        %360 = vmatpush.msra.mxu0 %v219
        %361 = vmatpush.msra.mxu0 %v216
        %362 = vmatpush.msra.mxu0 %v213
        %363 = vmatpush.msra.mxu0 %v210
        %364 = vmatpush.msra.mxu0 %v207
        %365 = vmatpush.msra.mxu0 %v204
        %366 = vmatpush.msra.mxu0 %v201
        %367 = vmatpush.msra.mxu0 %v198
        %368 = vmatpush.msra.mxu0 %v195
        %369 = vmatpush.msra.mxu0 %v192
        %370 = vmatpush.msra.mxu0 %v189
        %371 = vmatpush.msra.mxu0 %v186
        %372 = vmatpush.msra.mxu0 %v183
        %373 = vmatmul.f32.gmra.mxu0 %v179
        %v374 = vpop.f32.mrf.mxu0
        %v375 = vadd.f32 0.0, %v374
        %376 = vdwg.mxu0
        %377 = vmatpush.msra.mxu0 %v276
        %378 = vmatpush.msra.mxu0 %v273
        %379 = vmatpush.msra.mxu0 %v270
        %380 = vmatpush.msra.mxu0 %v267
        %381 = vmatpush.msra.mxu0 %v264
        %382 = vmatpush.msra.mxu0 %v261
        %383 = vmatpush.msra.mxu0 %v258
        %384 = vmatpush.msra.mxu0 %v255
        %385 = vmatpush.msra.mxu0 %v252
        %386 = vmatpush.msra.mxu0 %v249
        %387 = vmatpush.msra.mxu0 %v246
        %388 = vmatpush.msra.mxu0 %v243
        %389 = vmatpush.msra.mxu0 %v240
        %390 = vmatpush.msra.mxu0 %v237
        %391 = vmatpush.msra.mxu0 %v234
        %392 = vmatpush.msra.mxu0 %v231
        %393 = vmatmul.f32.gmra.mxu0 %v180
        %v394 = vpop.f32.mrf.mxu0
        %v395 = vadd.f32 %v375, %v394
        %396 = vdwg.mxu0
        %397 = vst [vmem:[%s178] sm:$0xff] %v315
        %398 = vst [vmem:[%s178 + $0x8] sm:$0xff] %v355
        %399 = vst [vmem:[%s178 + $0x10] sm:$0xff] %v395
        %s400 = sand.u32 %s75, 1
        %s401 = scalar_lea.sflag [#allocation4], %s400
        %s402 = sand.u32 %s75, 1
        %s403 = smul.addr %s402, 24
        %s404 = scalar_lea.vmem [#allocation7], %s403
        // Predicated region
        $region37: #{tpu_custom_call.1} parent=27 // pred_check
          %p405 = pneg %p85
        $region38: #{tpu_custom_call.1} parent=27 // pred_check_branch
          %407 = sbr.rel (%p405) target = $region40
        $region39: #{tpu_custom_call.1} parent=27 // pred_region
          %409 = vsyncadd %s401, 0
          %s410 = smul.addr %s20, 3
          %s411 = smul.addr %s410, 8
          %s412 = scalar_lea.hbm %s2, %s411
          %s414 = sshll.u32 %s404, 4
          %s415 = int_to_ptr.vmem [resolvable:$true] %s414
          %s416 = sshll.u32 %s412, 4
          %s417 = int_to_ptr.hbm [resolvable:$true] %s416
          %419 = dma.vmem_to_hbm [thread:$0]  %s415, 384, %s417, %s401
        $region40: #{tpu_custom_call.1} parent=27 // pred_fallthru
          _
      $region28: #{tpu_custom_call.1} parent=5 // pred_fallthru
        _
      %p420 = scmp.le.s32.totalorder 2, %s15
      // Predicated region
      $region41: #{tpu_custom_call.1} parent=5 // pred_check
        %p421 = pneg %p420
      $region42: #{tpu_custom_call.1} parent=5 // pred_check_branch
        %423 = sbr.rel (%p421) target = $region44
      $region43: #{tpu_custom_call.1} parent=5 // pred_region
        %s424 = ssub.s32 %s15, 2
        // Predicated region
        $region45: #{tpu_custom_call.1} parent=43 // pred_check
          %p425 = pneg %p91
        $region46: #{tpu_custom_call.1} parent=43 // pred_check_branch
          %427 = sbr.rel (%p425) target = $region48
        $region47: #{tpu_custom_call.1} parent=43 // pred_region
          %s428 = sand.u32 %s76, 1
          %s429 = scalar_lea.sflag [#allocation4], %s428
          %s430 = sand.u32 %s76, 1
          %s431 = smul.addr %s430, 24
          %s432 = scalar_lea.vmem [#allocation7], %s431
          %434 = dma.done %s429, 384
        $region48: #{tpu_custom_call.1} parent=43 // pred_fallthru
          _
      $region44: #{tpu_custom_call.1} parent=5 // pred_fallthru
        _
    $region6: #{tpu_custom_call.1} parent=1 // loop_footer
      %s19 = sadd.s32 1, %s15
    $region7: #{tpu_custom_call.1} parent=1 // loop_footer_branch
      %14 = sbr.rel target = $region3
    $region8: #{tpu_custom_call.1} parent=1 // loop_exit
      _
    %435 = vsyncpa [#allocation3], 1
    %s436 = scalar_lea.sflag [#allocation3], 1
    %437 = vsyncpa %s436, 1
    %438 = vsyncpa [#allocation6], 1
    %439 = vsyncpa [#allocation4], 1
    %s440 = scalar_lea.sflag [#allocation4], 1
    %441 = vsyncpa %s440, 1

</llo_original>
